<compile_context>
chip_gen: v6e
topology: v6e:2x2x1
jax: 0.10.0
libtpu: 0.0.40
codegen_flags: <defaults>
</compile_context>

<pallas_src>
import jax
import jax.numpy as jnp
from jax.experimental import pallas as pl
from jax.experimental.pallas import tpu as pltpu

CLAMP_RATIOMAX = 1e8
CLAMP_RATIOMIN = 1e-8
H_DIM = 32
TILE_B_DEFAULT = 2048   # 512-1024 is already plenty on v5e; 2048 amortizes the
                        # ~0.35us per-grid-step overhead on v6e/v7x and the
                        # double-buffered x tile is only ~120 KB f32.


def _round_up(n, m):
    return ((n + m - 1) // m) * m


def _softplus(x):
    # matches torch.nn.Softplus(beta=1, threshold=20)
    return jnp.where(x > 20.0, x, jnp.log1p(jnp.exp(jnp.minimum(x, 20.0))))


def ratio_model_kernel(x_ref,
                       w1_ref, b1_ref,
                       w2_ref, b2_ref,
                       w3_ref, b3_ref,
                       w4_ref, b4_ref,
                       o_ref):
    """x: (TILE_B, Din) f32.  w1..w3: PyTorch (out, in) layout, possibly bf16.
    b1..b3: (H, 1) f32.  w4: (H, 1) f32 column.  b4: (1, 1) f32.
    Output: (1, TILE_B) f32 (lane-dense)."""
    mm_dtype = w1_ref.dtype

    # Hoist bias reads once (cheap insurance against re-broadcast in any
    # future inner loop).
    b1 = b1_ref[...]
    b2 = b2_ref[...]
    b3 = b3_ref[...]
    b4 = b4_ref[...]

    x = x_ref[...].astype(mm_dtype)                           # (TILE_B, Din)

    # Layer 1: (H, Din) . (TILE_B, Din)^T -> (H, TILE_B)  (NT matmul on MXU,
    # contraction on the last dim of both operands; f32 accumulation).
    h = jax.lax.dot_general(w1_ref[...], x,
                            (((1,), (1,)), ((), ())),
                            preferred_element_type=jnp.float32)
    h = jnp.tanh(h + b1)                                      # (H, TILE_B) f32

    # Layers 2, 3: plain (H, H) @ (H, TILE_B) on the MXU, f32 accumulation.
    h = jnp.tanh(jnp.dot(w2_ref[...], h.astype(mm_dtype),
                         preferred_element_type=jnp.float32) + b2)
    h = jnp.tanh(jnp.dot(w3_ref[...], h.astype(mm_dtype),
                         preferred_element_type=jnp.float32) + b3)

    # Layer 4 (H -> 1): VPU mul + sublane reduce; stays f32 and lane-dense.
    y = jnp.sum(w4_ref[...] * h, axis=0, keepdims=True) + b4  # (1, TILE_B)

    y = _softplus(y)
    o_ref[...] = jnp.clip(y, CLAMP_RATIOMIN, CLAMP_RATIOMAX)


def ratio_model_forward(sazg, params, *, tile_b=TILE_B_DEFAULT,
                        matmul_dtype=jnp.bfloat16):
    """sazg: (B, s_dim + a_dim + 3*z_dim) float32.
    params: [(w (out,in), b (out,)), ...] in PyTorch Linear layout.
    Returns (B, 1) float32."""
    B, d_in = sazg.shape
    (w1, b1), (w2, b2), (w3, b3), (w4, b4) = params
    H = w1.shape[0]

    # Kernel-layout operands: first three weights cast for the MXU; biases as
    # (H, 1) columns; last layer kept f32 as a (H, 1) column vector.
    w1k = w1.astype(matmul_dtype)
    w2k = w2.astype(matmul_dtype)
    w3k = w3.astype(matmul_dtype)
    w4k = w4.reshape(H, 1).astype(jnp.float32)
    b1k = b1.reshape(H, 1).astype(jnp.float32)
    b2k = b2.reshape(H, 1).astype(jnp.float32)
    b3k = b3.reshape(H, 1).astype(jnp.float32)
    b4k = b4.reshape(1, 1).astype(jnp.float32)

    # Batch tiling: lane-dense output needs tile_b % 128 == 0; zero-pad tail.
    tb = min(tile_b, _round_up(B, 128))
    b_pad = _round_up(B, tb)
    x = sazg.astype(jnp.float32)
    if b_pad != B:
        x = jnp.pad(x, ((0, b_pad - B), (0, 0)))
    grid = (b_pad // tb,)

    resident = lambda i: (0, 0)   # weights/biases: fetched once, stay in VMEM

    flops = 2 * b_pad * (d_in * H + 2 * H * H + H)
    transcendentals = b_pad * (3 * H + 2)
    param_bytes = sum(int(a.size) * a.dtype.itemsize
                      for a in (w1k, b1k, w2k, b2k, w3k, b3k, w4k, b4k))
    bytes_accessed = b_pad * d_in * 4 + b_pad * 4 + param_bytes

    out = pl.pallas_call(
        ratio_model_kernel,
        out_shape=jax.ShapeDtypeStruct((1, b_pad), jnp.float32),
        grid=grid,
        in_specs=[
            pl.BlockSpec((tb, d_in), lambda i: (i, 0)),   # x: streamed tiles
            pl.BlockSpec((H, d_in), resident),            # w1
            pl.BlockSpec((H, 1), resident),               # b1
            pl.BlockSpec((H, H), resident),               # w2
            pl.BlockSpec((H, 1), resident),               # b2
            pl.BlockSpec((H, H), resident),               # w3
            pl.BlockSpec((H, 1), resident),               # b3
            pl.BlockSpec((H, 1), resident),               # w4 (column)
            pl.BlockSpec((1, 1), resident),               # b4
        ],
        out_specs=pl.BlockSpec((1, tb), lambda i: (0, i)),
        compiler_params=pltpu.CompilerParams(
            dimension_semantics=("parallel",)),
        cost_estimate=pl.CostEstimate(
            flops=flops,
            transcendentals=transcendentals,
            bytes_accessed=bytes_accessed),
    )(x, w1k, b1k, w2k, b2k, w3k, b3k, w4k, b4k)

    return out[:, :B].reshape(B, 1)


def init_params(key, d_in, h_dim=H_DIM):
    """PyTorch Linear default init: w (out, in), b (out,), uniform +/- 1/sqrt(fan_in)."""
    dims = [(d_in, h_dim), (h_dim, h_dim), (h_dim, h_dim), (h_dim, 1)]
    params = []
    for fi, fo in dims:
        key, kw, kb = jax.random.split(key, 3)
        bound = 1.0 / (fi ** 0.5)
        w = jax.random.uniform(kw, (fo, fi), jnp.float32, -bound, bound)
        b = jax.random.uniform(kb, (fo,), jnp.float32, -bound, bound)
        params.append((w, b))
    return params


def ratio_model_ref(sazg, params):
    """Plain-JAX reference (PyTorch semantics: y = x @ W.T + b)."""
    (w1, b1), (w2, b2), (w3, b3), (w4, b4) = params
    h = jnp.tanh(sazg @ w1.T + b1)
    h = jnp.tanh(h @ w2.T + b2)
    h = jnp.tanh(h @ w3.T + b3)
    y = _softplus(h @ w4.T + b4)
    return jnp.clip(y, CLAMP_RATIOMIN, CLAMP_RATIOMAX)


if __name__ == "__main__":
    # Shapes implied by the module: s_dim=4, a_dim=2, z_dim=3 -> Din = 4+2+9 = 15
    s_dim, a_dim, z_dim = 4, 2, 3
    d_in = s_dim + a_dim + 3 * z_dim
    batch = 8

    key = jax.random.PRNGKey(0)
    key, kx = jax.random.split(key)
    sazg = jax.random.normal(kx, (batch, d_in), jnp.float32)
    params = init_params(key, d_in)

    ref = ratio_model_ref(sazg, params)

    # f32-matmul path: tight agreement with the reference.
    out_f32 = jax.block_until_ready(
        ratio_model_forward(sazg, params, matmul_dtype=jnp.float32))
    assert out_f32.shape == (batch, 1)
    assert jnp.allclose(out_f32, ref, rtol=1e-5, atol=1e-5), (out_f32, ref)

    # Default bf16-matmul (f32 accumulation) path: looser tolerance.
    out = jax.block_until_ready(ratio_model_forward(sazg, params))
    assert out.shape == (batch, 1)
    assert jnp.allclose(out, ref, rtol=5e-2, atol=5e-2), (out, ref)
    assert jnp.all(out >= CLAMP_RATIOMIN) and jnp.all(out <= CLAMP_RATIOMAX)

    print("KERNEL_OK")
</pallas_src>

<mosaic_0001>
module attributes {stable_mosaic.version = 11 : i64} {
  func.func @ratio_model_kernel(%arg0: i32, %arg1: memref<128x15xf32, #tpu.memory_space<vmem>>, %arg2: memref<32x15xf32, #tpu.memory_space<vmem>>, %arg3: memref<32x1xf32, #tpu.memory_space<vmem>>, %arg4: memref<32x32xf32, #tpu.memory_space<vmem>>, %arg5: memref<32x1xf32, #tpu.memory_space<vmem>>, %arg6: memref<32x32xf32, #tpu.memory_space<vmem>>, %arg7: memref<32x1xf32, #tpu.memory_space<vmem>>, %arg8: memref<32x1xf32, #tpu.memory_space<vmem>>, %arg9: memref<1x1xf32, #tpu.memory_space<vmem>>, %arg10: memref<1x128xf32, #tpu.memory_space<vmem>>) attributes {dimension_semantics = [#tpu.dimension_semantics<parallel>], iteration_bounds = array<i64: 1>, scalar_prefetch = 0 : i64, scratch_operands = 0 : i64, tpu.core_type = #tpu.core_type<tc>, window_params = [{transform_indices = @transform_0, window_bounds = array<i64: 128, 15>}, {pipeline_mode = #tpu.pipeline_mode<synchronous>, transform_indices = @transform_1, window_bounds = array<i64: 32, 15>}, {pipeline_mode = #tpu.pipeline_mode<synchronous>, transform_indices = @transform_2, window_bounds = array<i64: 32, 1>}, {pipeline_mode = #tpu.pipeline_mode<synchronous>, transform_indices = @transform_3, window_bounds = array<i64: 32, 32>}, {pipeline_mode = #tpu.pipeline_mode<synchronous>, transform_indices = @transform_4, window_bounds = array<i64: 32, 1>}, {pipeline_mode = #tpu.pipeline_mode<synchronous>, transform_indices = @transform_5, window_bounds = array<i64: 32, 32>}, {pipeline_mode = #tpu.pipeline_mode<synchronous>, transform_indices = @transform_6, window_bounds = array<i64: 32, 1>}, {pipeline_mode = #tpu.pipeline_mode<synchronous>, transform_indices = @transform_7, window_bounds = array<i64: 32, 1>}, {pipeline_mode = #tpu.pipeline_mode<synchronous>, transform_indices = @transform_8, window_bounds = array<i64: 1, 1>}, {transform_indices = @transform_9, window_bounds = array<i64: 1, 128>}]} {
    %c0 = arith.constant 0 : index
    %c0_0 = arith.constant 0 : index
    %0 = vector.load %arg3[%c0, %c0_0] : memref<32x1xf32, #tpu.memory_space<vmem>>, vector<32x1xf32>
    %c0_1 = arith.constant 0 : index
    %c0_2 = arith.constant 0 : index
    %1 = vector.load %arg5[%c0_1, %c0_2] : memref<32x1xf32, #tpu.memory_space<vmem>>, vector<32x1xf32>
    %c0_3 = arith.constant 0 : index
    %c0_4 = arith.constant 0 : index
    %2 = vector.load %arg7[%c0_3, %c0_4] : memref<32x1xf32, #tpu.memory_space<vmem>>, vector<32x1xf32>
    %c0_5 = arith.constant 0 : index
    %c0_6 = arith.constant 0 : index
    %3 = vector.load %arg9[%c0_5, %c0_6] : memref<1x1xf32, #tpu.memory_space<vmem>>, vector<1x1xf32>
    %c0_7 = arith.constant 0 : index
    %c0_8 = arith.constant 0 : index
    %4 = vector.load %arg1[%c0_7, %c0_8] : memref<128x15xf32, #tpu.memory_space<vmem>>, vector<128x15xf32>
    %c0_9 = arith.constant 0 : index
    %c0_10 = arith.constant 0 : index
    %5 = vector.load %arg2[%c0_9, %c0_10] : memref<32x15xf32, #tpu.memory_space<vmem>>, vector<32x15xf32>
    %cst = arith.constant dense<0.000000e+00> : vector<32x128xf32>
    %6 = tpu.matmul %5, %4, %cst {dimension_numbers = #tpu.dot_dimension_numbers<[1], [1], [0], [0], [0, 0, 1, 0], [], []>} : vector<32x15xf32>, vector<128x15xf32>, vector<32x128xf32> -> vector<32x128xf32>
    %7 = vector.broadcast %0 : vector<32x1xf32> to vector<32x128xf32>
    %8 = arith.addf %6, %7 : vector<32x128xf32>
    %9 = math.tanh %8 : vector<32x128xf32>
    %c0_11 = arith.constant 0 : index
    %c0_12 = arith.constant 0 : index
    %10 = vector.load %arg4[%c0_11, %c0_12] : memref<32x32xf32, #tpu.memory_space<vmem>>, vector<32x32xf32>
    %cst_13 = arith.constant dense<0.000000e+00> : vector<32x128xf32>
    %11 = tpu.matmul %10, %9, %cst_13 {dimension_numbers = #tpu.dot_dimension_numbers<[1], [0], [0], [1], [0, 0, 1, 1], [], []>} : vector<32x32xf32>, vector<32x128xf32>, vector<32x128xf32> -> vector<32x128xf32>
    %12 = vector.broadcast %1 : vector<32x1xf32> to vector<32x128xf32>
    %13 = arith.addf %11, %12 : vector<32x128xf32>
    %14 = math.tanh %13 : vector<32x128xf32>
    %c0_14 = arith.constant 0 : index
    %c0_15 = arith.constant 0 : index
    %15 = vector.load %arg6[%c0_14, %c0_15] : memref<32x32xf32, #tpu.memory_space<vmem>>, vector<32x32xf32>
    %cst_16 = arith.constant dense<0.000000e+00> : vector<32x128xf32>
    %16 = tpu.matmul %15, %14, %cst_16 {dimension_numbers = #tpu.dot_dimension_numbers<[1], [0], [0], [1], [0, 0, 1, 1], [], []>} : vector<32x32xf32>, vector<32x128xf32>, vector<32x128xf32> -> vector<32x128xf32>
    %17 = vector.broadcast %2 : vector<32x1xf32> to vector<32x128xf32>
    %18 = arith.addf %16, %17 : vector<32x128xf32>
    %19 = math.tanh %18 : vector<32x128xf32>
    %c0_17 = arith.constant 0 : index
    %c0_18 = arith.constant 0 : index
    %20 = vector.load %arg8[%c0_17, %c0_18] : memref<32x1xf32, #tpu.memory_space<vmem>>, vector<32x1xf32>
    %21 = vector.broadcast %20 : vector<32x1xf32> to vector<32x128xf32>
    %22 = arith.mulf %21, %19 : vector<32x128xf32>
    %cst_19 = arith.constant dense<0.000000e+00> : vector<128xf32>
    %23 = vector.multi_reduction <add>, %22, %cst_19 [0] : vector<32x128xf32> to vector<128xf32>
    %24 = vector.shape_cast %23 : vector<128xf32> to vector<1x128xf32>
    %25 = vector.broadcast %3 : vector<1x1xf32> to vector<1x128xf32>
    %26 = arith.addf %24, %25 : vector<1x128xf32>
    %cst_20 = arith.constant 2.000000e+01 : f32
    %27 = vector.broadcast %cst_20 : f32 to vector<1x128xf32>
    %28 = arith.cmpf ogt, %26, %27 : vector<1x128xf32>
    %cst_21 = arith.constant 2.000000e+01 : f32
    %29 = vector.broadcast %cst_21 : f32 to vector<1x128xf32>
    %30 = arith.minimumf %26, %29 : vector<1x128xf32>
    %31 = math.exp %30 : vector<1x128xf32>
    %32 = math.log1p %31 : vector<1x128xf32>
    %33 = arith.select %28, %26, %32 : vector<1x128xi1>, vector<1x128xf32>
    %cst_22 = arith.constant 9.99999993E-9 : f32
    %cst_23 = arith.constant 1.000000e+08 : f32
    %34 = vector.broadcast %cst_22 : f32 to vector<1x128xf32>
    %35 = arith.maximumf %34, %33 : vector<1x128xf32>
    %36 = vector.broadcast %cst_23 : f32 to vector<1x128xf32>
    %37 = arith.minimumf %36, %35 : vector<1x128xf32>
    %c0_24 = arith.constant 0 : index
    %c0_25 = arith.constant 0 : index
    %38 = vector.load %arg10[%c0_24, %c0_25] : memref<1x128xf32, #tpu.memory_space<vmem>>, vector<1x128xf32>
    tpu.vector_store %arg10[%c0_24, %c0_25], %37 {strides = array<i32>} : memref<1x128xf32, #tpu.memory_space<vmem>>, vector<1x128xf32>,
    return
  }
  func.func @transform_0(%arg0: i32) -> (i32, i32) {
    %c0_i32 = arith.constant 0 : i32
    %c0_i32_0 = arith.constant 0 : i32
    return %arg0, %c0_i32 : i32, i32
  }
  func.func @transform_1(%arg0: i32) -> (i32, i32) {
    %c0_i32 = arith.constant 0 : i32
    %c0_i32_0 = arith.constant 0 : i32
    %c0_i32_1 = arith.constant 0 : i32
    return %c0_i32, %c0_i32_0 : i32, i32
  }
  func.func @transform_2(%arg0: i32) -> (i32, i32) {
    %c0_i32 = arith.constant 0 : i32
    %c0_i32_0 = arith.constant 0 : i32
    %c0_i32_1 = arith.constant 0 : i32
    return %c0_i32, %c0_i32_0 : i32, i32
  }
  func.func @transform_3(%arg0: i32) -> (i32, i32) {
    %c0_i32 = arith.constant 0 : i32
    %c0_i32_0 = arith.constant 0 : i32
    %c0_i32_1 = arith.constant 0 : i32
    return %c0_i32, %c0_i32_0 : i32, i32
  }
  func.func @transform_4(%arg0: i32) -> (i32, i32) {
    %c0_i32 = arith.constant 0 : i32
    %c0_i32_0 = arith.constant 0 : i32
    %c0_i32_1 = arith.constant 0 : i32
    return %c0_i32, %c0_i32_0 : i32, i32
  }
  func.func @transform_5(%arg0: i32) -> (i32, i32) {
    %c0_i32 = arith.constant 0 : i32
    %c0_i32_0 = arith.constant 0 : i32
    %c0_i32_1 = arith.constant 0 : i32
    return %c0_i32, %c0_i32_0 : i32, i32
  }
  func.func @transform_6(%arg0: i32) -> (i32, i32) {
    %c0_i32 = arith.constant 0 : i32
    %c0_i32_0 = arith.constant 0 : i32
    %c0_i32_1 = arith.constant 0 : i32
    return %c0_i32, %c0_i32_0 : i32, i32
  }
  func.func @transform_7(%arg0: i32) -> (i32, i32) {
    %c0_i32 = arith.constant 0 : i32
    %c0_i32_0 = arith.constant 0 : i32
    %c0_i32_1 = arith.constant 0 : i32
    return %c0_i32, %c0_i32_0 : i32, i32
  }
  func.func @transform_8(%arg0: i32) -> (i32, i32) {
    %c0_i32 = arith.constant 0 : i32
    %c0_i32_0 = arith.constant 0 : i32
    %c0_i32_1 = arith.constant 0 : i32
    return %c0_i32, %c0_i32_0 : i32, i32
  }
  func.func @transform_9(%arg0: i32) -> (i32, i32) {
    %c0_i32 = arith.constant 0 : i32
    %c0_i32_0 = arith.constant 0 : i32
    return %c0_i32, %arg0 : i32, i32
  }
}

</mosaic_0001>

<llo_original>
// kernel: tpu_custom_call.1
$region0: #{tpu_custom_call.1}
  #allocation0 [shape = 'u32[]', space=smem, size = 0x4, offset = 0x4, fixed_abs, tag = 'smem constant byte address 0x4 - core index']
  #allocation1 [shape = 'u32[144,128]{1,0:T(1,128)}', space=vmem, size = 0x12000, scoped, tag = 'internal scratch']
  #allocation2 [shape = 'f32[1,1]{1,0:T(1,128)S(1)}', space=vmem, size = 0x200, scoped, tag = 'scoped memory for tpu_custom_call.1']
  %s0 = inlined_call_operand.vmem [shape: f32[128,15], index: 0, kind: input, shape index: {}]
  %s1 = inlined_call_operand.vmem [shape: f32[32,15], index: 1, kind: input, shape index: {}]
  %s2 = inlined_call_operand.vmem [shape: f32[32,1], index: 2, kind: input, shape index: {}]
  %s3 = inlined_call_operand.vmem [shape: f32[32,32], index: 3, kind: input, shape index: {}]
  %s4 = inlined_call_operand.vmem [shape: f32[32,1], index: 4, kind: input, shape index: {}]
  %s5 = inlined_call_operand.vmem [shape: f32[32,32], index: 5, kind: input, shape index: {}]
  %s6 = inlined_call_operand.vmem [shape: f32[32,1], index: 6, kind: input, shape index: {}]
  %s7 = inlined_call_operand.vmem [shape: f32[32,1], index: 7, kind: input, shape index: {}]
  %s8 = inlined_call_operand.<no memory space> [shape: f32[1,1], index: 8, kind: input, shape index: {}]
  %s9 = inlined_call_operand.hbm [shape: f32[1,128], index: 9, kind: output, shape index: {}]
  %s10 = sld [smem:[#allocation0]]
  $region46: #{tpu_custom_call.1} parent=0
    _
  %s12 = ssub.s32 1, %s10
  %s13 = scalar_select 0, %s12, %s10
  %v14 = vstv %s8
  %15 = vst [vmem:[#allocation2] sm:$0x1] %v14
  $region1: #{tpu_custom_call.1} parent=0
    #allocation3 [shape = 'u8[512]{0}', space=vmem, size = 0x400, scoped, tag = 'output window, operand 0, single buffered']
    #allocation4 [shape = 's32[1]{0}', space=sflag, size = 0x4, scoped, tag = 'scoped memory for tpu_custom_call.1']
    %16 = vsyncpa [#allocation4], 0
    // Predicated region
    $region2: #{tpu_custom_call.1} parent=1 // pred_check
      _
    $region3: #{tpu_custom_call.1} parent=1 // pred_check_branch
      %18 = sbr.rel (0) target = $region5
    $region4: #{tpu_custom_call.1} parent=1 // pred_region
      _
    $region5: #{tpu_custom_call.1} parent=1 // pred_fallthru
      _
    // Predicated region
    $region6: #{tpu_custom_call.1} parent=1 // pred_check
      _
    $region7: #{tpu_custom_call.1} parent=1 // pred_check_branch
      %20 = sbr.rel (0) target = $region9
    $region8: #{tpu_custom_call.1} parent=1 // pred_region
      _
    $region9: #{tpu_custom_call.1} parent=1 // pred_fallthru
      _
    // Predicated region
    $region10: #{tpu_custom_call.1} parent=1 // pred_check
      _
    $region11: #{tpu_custom_call.1} parent=1 // pred_check_branch
      %22 = sbr.rel (0) target = $region13
    $region12: #{tpu_custom_call.1} parent=1 // pred_region
      _
    $region13: #{tpu_custom_call.1} parent=1 // pred_fallthru
      _
    // Predicated region
    $region14: #{tpu_custom_call.1} parent=1 // pred_check
      _
    $region15: #{tpu_custom_call.1} parent=1 // pred_check_branch
      %24 = sbr.rel (0) target = $region17
    $region16: #{tpu_custom_call.1} parent=1 // pred_region
      _
    $region17: #{tpu_custom_call.1} parent=1 // pred_fallthru
      _
    // Predicated region
    $region18: #{tpu_custom_call.1} parent=1 // pred_check
      _
    $region19: #{tpu_custom_call.1} parent=1 // pred_check_branch
      %26 = sbr.rel (0) target = $region21
    $region20: #{tpu_custom_call.1} parent=1 // pred_region
      _
    $region21: #{tpu_custom_call.1} parent=1 // pred_fallthru
      _
    // Predicated region
    $region22: #{tpu_custom_call.1} parent=1 // pred_check
      _
    $region23: #{tpu_custom_call.1} parent=1 // pred_check_branch
      %28 = sbr.rel (0) target = $region25
    $region24: #{tpu_custom_call.1} parent=1 // pred_region
      _
    $region25: #{tpu_custom_call.1} parent=1 // pred_fallthru
      _
    // Predicated region
    $region26: #{tpu_custom_call.1} parent=1 // pred_check
      _
    $region27: #{tpu_custom_call.1} parent=1 // pred_check_branch
      %30 = sbr.rel (0) target = $region29
    $region28: #{tpu_custom_call.1} parent=1 // pred_region
      _
    $region29: #{tpu_custom_call.1} parent=1 // pred_fallthru
      _
    // Predicated region
    $region30: #{tpu_custom_call.1} parent=1 // pred_check
      _
    $region31: #{tpu_custom_call.1} parent=1 // pred_check_branch
      %32 = sbr.rel (0) target = $region33
    $region32: #{tpu_custom_call.1} parent=1 // pred_region
      _
    $region33: #{tpu_custom_call.1} parent=1 // pred_fallthru
      _
    // Predicated region
    $region34: #{tpu_custom_call.1} parent=1 // pred_check
      _
    $region35: #{tpu_custom_call.1} parent=1 // pred_check_branch
      %34 = sbr.rel (0) target = $region37
    $region36: #{tpu_custom_call.1} parent=1 // pred_region
      _
    $region37: #{tpu_custom_call.1} parent=1 // pred_fallthru
      _
    %v35 = vld [vmem:[%s2] sm:$0xff]
    %v36 = vld [vmem:[%s2 + $0x8] sm:$0xff]
    %v37 = vld [vmem:[%s2 + $0x10] sm:$0xff]
    %v38 = vld [vmem:[%s2 + $0x18] sm:$0xff]
    %v39 = vld [vmem:[%s4] sm:$0xff]
    %v40 = vld [vmem:[%s4 + $0x8] sm:$0xff]
    %v41 = vld [vmem:[%s4 + $0x10] sm:$0xff]
    %v42 = vld [vmem:[%s4 + $0x18] sm:$0xff]
    %v43 = vld [vmem:[%s6] sm:$0xff]
    %v44 = vld [vmem:[%s6 + $0x8] sm:$0xff]
    %v45 = vld [vmem:[%s6 + $0x10] sm:$0xff]
    %v46 = vld [vmem:[%s6 + $0x18] sm:$0xff]
    %v47 = vld [vmem:[#allocation2] sm:$0x1]
    %v48 = vld [vmem:[%s0] sm:$0xff]
    %v49 = vld [vmem:[%s0 + $0x8] sm:$0xff]
    %v50 = vld [vmem:[%s0 + $0x10] sm:$0xff]
    %v51 = vld [vmem:[%s0 + $0x18] sm:$0xff]
    %v52 = vld [vmem:[%s0 + $0x20] sm:$0xff]
    %v53 = vld [vmem:[%s0 + $0x28] sm:$0xff]
    %v54 = vld [vmem:[%s0 + $0x30] sm:$0xff]
    %v55 = vld [vmem:[%s0 + $0x38] sm:$0xff]
    %v56 = vld [vmem:[%s0 + $0x40] sm:$0xff]
    %v57 = vld [vmem:[%s0 + $0x48] sm:$0xff]
    %v58 = vld [vmem:[%s0 + $0x50] sm:$0xff]
    %v59 = vld [vmem:[%s0 + $0x58] sm:$0xff]
    %v60 = vld [vmem:[%s0 + $0x60] sm:$0xff]
    %v61 = vld [vmem:[%s0 + $0x68] sm:$0xff]
    %v62 = vld [vmem:[%s0 + $0x70] sm:$0xff]
    %v63 = vld [vmem:[%s0 + $0x78] sm:$0xff]
    %v64 = vld [vmem:[%s1] sm:$0xff]
    %v65 = vld [vmem:[%s1 + $0x8] sm:$0xff]
    %v66 = vld [vmem:[%s1 + $0x10] sm:$0xff]
    %v67 = vld [vmem:[%s1 + $0x18] sm:$0xff]
    %69 = vset.pattern.permute.xlu0 0
    %70 = vperm.xlu0 %69, %v35
    %v71 = vpop.permute.xlu0 %70
    %74 = vset.pattern.permute.xlu0 0
    %75 = vperm.xlu0 %74, %v36
    %v76 = vpop.permute.xlu0 %75
    %79 = vset.pattern.permute.xlu0 0
    %80 = vperm.xlu0 %79, %v37
    %v81 = vpop.permute.xlu0 %80
    %84 = vset.pattern.permute.xlu0 0
    %85 = vperm.xlu0 %84, %v38
    %v86 = vpop.permute.xlu0 %85
    %vm88 = vcmask 121856
    %v90 = vsel %vm88, %v64, 0
    %v93 = vsel %vm88, %v65, 0
    %v96 = vsel %vm88, %v66, 0
    %v99 = vsel %vm88, %v67, 0
    %v102 = vsel %vm88, %v48, 0
    %v105 = vsel %vm88, %v49, 0
    %v108 = vsel %vm88, %v50, 0
    %v111 = vsel %vm88, %v51, 0
    %v114 = vsel %vm88, %v52, 0
    %v117 = vsel %vm88, %v53, 0
    %v120 = vsel %vm88, %v54, 0
    %v123 = vsel %vm88, %v55, 0
    %v126 = vsel %vm88, %v56, 0
    %v129 = vsel %vm88, %v57, 0
    %v132 = vsel %vm88, %v58, 0
    %v135 = vsel %vm88, %v59, 0
    %v138 = vsel %vm88, %v60, 0
    %v141 = vsel %vm88, %v61, 0
    %v144 = vsel %vm88, %v62, 0
    %v147 = vsel %vm88, %v63, 0
    %149 = vmatprep.subr.mxu0 0.0
    %150 = vmatpush1.xpose.msra.mxu0 %v147
    %151 = vmatprep.subr.mxu0 0.0
    %152 = vmatpush1.xpose.msra.mxu0 %v144
    %153 = vmatprep.subr.mxu0 0.0
    %154 = vmatpush1.xpose.msra.mxu0 %v141
    %155 = vmatprep.subr.mxu0 0.0
    %156 = vmatpush1.xpose.msra.mxu0 %v138
    %157 = vmatprep.subr.mxu0 0.0
    %158 = vmatpush1.xpose.msra.mxu0 %v135
    %159 = vmatprep.subr.mxu0 0.0
    %160 = vmatpush1.xpose.msra.mxu0 %v132
    %161 = vmatprep.subr.mxu0 0.0
    %162 = vmatpush1.xpose.msra.mxu0 %v129
    %163 = vmatprep.subr.mxu0 0.0
    %164 = vmatpush1.xpose.msra.mxu0 %v126
    %165 = vmatprep.subr.mxu0 0.0
    %166 = vmatpush1.xpose.msra.mxu0 %v123
    %167 = vmatprep.subr.mxu0 0.0
    %168 = vmatpush1.xpose.msra.mxu0 %v120
    %169 = vmatprep.subr.mxu0 0.0
    %170 = vmatpush1.xpose.msra.mxu0 %v117
    %171 = vmatprep.subr.mxu0 0.0
    %172 = vmatpush1.xpose.msra.mxu0 %v114
    %173 = vmatprep.subr.mxu0 0.0
    %174 = vmatpush1.xpose.msra.mxu0 %v111
    %175 = vmatprep.subr.mxu0 0.0
    %176 = vmatpush1.xpose.msra.mxu0 %v108
    %177 = vmatprep.subr.mxu0 0.0
    %178 = vmatpush1.xpose.msra.mxu0 %v105
    %179 = vmatprep.subr.mxu0 0.0
    %180 = vmatpush1.xpose.msra.mxu0 %v102
    %181 = vmatprep.subr.mxu0 0.0
    %182 = vmatpush2.xpose.msra.mxu0 0.0
    %183 = vmatprep.subr.mxu0 0.0
    %184 = vmatpush2.xpose.msra.mxu0 0.0
    %185 = vmatprep.subr.mxu0 0.0
    %186 = vmatpush2.xpose.msra.mxu0 0.0
    %187 = vmatprep.subr.mxu0 0.0
    %188 = vmatpush2.xpose.msra.mxu0 0.0
    %189 = vmatprep.subr.mxu0 0.0
    %190 = vmatpush2.xpose.msra.mxu0 0.0
    %191 = vmatprep.subr.mxu0 0.0
    %192 = vmatpush2.xpose.msra.mxu0 0.0
    %193 = vmatprep.subr.mxu0 0.0
    %194 = vmatpush2.xpose.msra.mxu0 0.0
    %195 = vmatprep.subr.mxu0 0.0
    %196 = vmatpush2.xpose.msra.mxu0 0.0
    %197 = vmatprep.subr.mxu0 0.0
    %198 = vmatpush2.xpose.msra.mxu0 0.0
    %199 = vmatprep.subr.mxu0 0.0
    %200 = vmatpush2.xpose.msra.mxu0 0.0
    %201 = vmatprep.subr.mxu0 0.0
    %202 = vmatpush2.xpose.msra.mxu0 0.0
    %203 = vmatprep.subr.mxu0 0.0
    %204 = vmatpush2.xpose.msra.mxu0 0.0
    %205 = vmatprep.subr.mxu0 0.0
    %206 = vmatpush2.xpose.msra.mxu0 0.0
    %207 = vmatprep.subr.mxu0 0.0
    %208 = vmatpush2.xpose.msra.mxu0 0.0
    %209 = vmatprep.subr.mxu0 0.0
    %210 = vmatpush2.xpose.msra.mxu0 0.0
    %211 = vmatprep.subr.mxu0 0.0
    %212 = vmatpush2.xpose.msra.mxu0 0.0
    %213 = vmatprep.mubr.f32.mxu0 0.0
    %214 = vmatmul.mubr.f32.gmra.mxu0 %v90
    %v215 = vpop.f32.mrf.mxu0
    %v216 = vadd.f32 %v71, %v215
    %v217 = vpop.f32.mrf.mxu0
    %218 = vmatprep.mubr.f32.mxu0 0.0
    %219 = vmatmul.mubr.f32.gmra.mxu0 %v93
    %v220 = vpop.f32.mrf.mxu0
    %v221 = vadd.f32 %v76, %v220
    %v222 = vpop.f32.mrf.mxu0
    %223 = vmatprep.mubr.f32.mxu0 0.0
    %224 = vmatmul.mubr.f32.gmra.mxu0 %v96
    %v225 = vpop.f32.mrf.mxu0
    %v226 = vadd.f32 %v81, %v225
    %v227 = vpop.f32.mrf.mxu0
    %228 = vmatprep.mubr.f32.mxu0 0.0
    %229 = vmatmul.mubr.f32.gmra.mxu0 %v99
    %v230 = vpop.f32.mrf.mxu0
    %v231 = vadd.f32 %v86, %v230
    %v232 = vpop.f32.mrf.mxu0
    %233 = vdwg.mxu0
    %v234 = vtanh.pop %v216
    %v235 = vtanh.pop %v221
    %v236 = vtanh.pop %v226
    %v237 = vtanh.pop %v231
    %v238 = vld [vmem:[%s3] sm:$0xff]
    %v239 = vld [vmem:[%s3 + $0x8] sm:$0xff]
    %v240 = vld [vmem:[%s3 + $0x10] sm:$0xff]
    %v241 = vld [vmem:[%s3 + $0x18] sm:$0xff]
    %243 = vset.pattern.permute.xlu0 0
    %244 = vperm.xlu0 %243, %v39
    %v245 = vpop.permute.xlu0 %244
    %248 = vset.pattern.permute.xlu0 0
    %249 = vperm.xlu0 %248, %v40
    %v250 = vpop.permute.xlu0 %249
    %253 = vset.pattern.permute.xlu0 0
    %254 = vperm.xlu0 %253, %v41
    %v255 = vpop.permute.xlu0 %254
    %258 = vset.pattern.permute.xlu0 0
    %259 = vperm.xlu0 %258, %v42
    %v260 = vpop.permute.xlu0 %259
    %vm262 = vcmask 261120
    %v264 = vsel %vm262, %v238, 0
    %v267 = vsel %vm262, %v239, 0
    %v270 = vsel %vm262, %v240, 0
    %v273 = vsel %vm262, %v241, 0
    %275 = vmatprep.subr.mxu0 0.0
    %276 = vmatpush1.msra.mxu0 0.0
    %277 = vmatprep.subr.mxu0 0.0
    %278 = vmatpush1.msra.mxu0 0.0
    %279 = vmatprep.subr.mxu0 0.0
    %280 = vmatpush1.msra.mxu0 0.0
    %281 = vmatprep.subr.mxu0 0.0
    %282 = vmatpush1.msra.mxu0 0.0
    %283 = vmatprep.subr.mxu0 0.0
    %284 = vmatpush1.msra.mxu0 0.0
    %285 = vmatprep.subr.mxu0 0.0
    %286 = vmatpush1.msra.mxu0 0.0
    %287 = vmatprep.subr.mxu0 0.0
    %288 = vmatpush1.msra.mxu0 0.0
    %289 = vmatprep.subr.mxu0 0.0
    %290 = vmatpush1.msra.mxu0 0.0
    %291 = vmatprep.subr.mxu0 0.0
    %292 = vmatpush1.msra.mxu0 0.0
    %293 = vmatprep.subr.mxu0 0.0
    %294 = vmatpush1.msra.mxu0 0.0
    %295 = vmatprep.subr.mxu0 0.0
    %296 = vmatpush1.msra.mxu0 0.0
    %297 = vmatprep.subr.mxu0 0.0
    %298 = vmatpush1.msra.mxu0 0.0
    %299 = vmatprep.subr.mxu0 0.0
    %300 = vmatpush1.msra.mxu0 %v237
    %301 = vmatprep.subr.mxu0 0.0
    %302 = vmatpush1.msra.mxu0 %v236
    %303 = vmatprep.subr.mxu0 0.0
    %304 = vmatpush1.msra.mxu0 %v235
    %305 = vmatprep.subr.mxu0 0.0
    %306 = vmatpush1.msra.mxu0 %v234
    %307 = vmatprep.subr.mxu0 0.0
    %308 = vmatpush2.msra.mxu0 0.0
    %309 = vmatprep.subr.mxu0 0.0
    %310 = vmatpush2.msra.mxu0 0.0
    %311 = vmatprep.subr.mxu0 0.0
    %312 = vmatpush2.msra.mxu0 0.0
    %313 = vmatprep.subr.mxu0 0.0
    %314 = vmatpush2.msra.mxu0 0.0
    %315 = vmatprep.subr.mxu0 0.0
    %316 = vmatpush2.msra.mxu0 0.0
    %317 = vmatprep.subr.mxu0 0.0
    %318 = vmatpush2.msra.mxu0 0.0
    %319 = vmatprep.subr.mxu0 0.0
    %320 = vmatpush2.msra.mxu0 0.0
    %321 = vmatprep.subr.mxu0 0.0
    %322 = vmatpush2.msra.mxu0 0.0
    %323 = vmatprep.subr.mxu0 0.0
    %324 = vmatpush2.msra.mxu0 0.0
    %325 = vmatprep.subr.mxu0 0.0
    %326 = vmatpush2.msra.mxu0 0.0
    %327 = vmatprep.subr.mxu0 0.0
    %328 = vmatpush2.msra.mxu0 0.0
    %329 = vmatprep.subr.mxu0 0.0
    %330 = vmatpush2.msra.mxu0 0.0
    %331 = vmatprep.subr.mxu0 0.0
    %332 = vmatpush2.msra.mxu0 0.0
    %333 = vmatprep.subr.mxu0 0.0
    %334 = vmatpush2.msra.mxu0 0.0
    %335 = vmatprep.subr.mxu0 0.0
    %336 = vmatpush2.msra.mxu0 0.0
    %337 = vmatprep.subr.mxu0 0.0
    %338 = vmatpush2.msra.mxu0 0.0
    %339 = vmatprep.mubr.f32.mxu0 0.0
    %340 = vmatmul.mubr.f32.gmra.mxu0 %v264
    %v341 = vpop.f32.mrf.mxu0
    %v342 = vadd.f32 %v245, %v341
    %v343 = vpop.f32.mrf.mxu0
    %344 = vmatprep.mubr.f32.mxu0 0.0
    %345 = vmatmul.mubr.f32.gmra.mxu0 %v267
    %v346 = vpop.f32.mrf.mxu0
    %v347 = vadd.f32 %v250, %v346
    %v348 = vpop.f32.mrf.mxu0
    %349 = vmatprep.mubr.f32.mxu0 0.0
    %350 = vmatmul.mubr.f32.gmra.mxu0 %v270
    %v351 = vpop.f32.mrf.mxu0
    %v352 = vadd.f32 %v255, %v351
    %v353 = vpop.f32.mrf.mxu0
    %354 = vmatprep.mubr.f32.mxu0 0.0
    %355 = vmatmul.mubr.f32.gmra.mxu0 %v273
    %v356 = vpop.f32.mrf.mxu0
    %v357 = vadd.f32 %v260, %v356
    %v358 = vpop.f32.mrf.mxu0
    %359 = vdwg.mxu0
    %v360 = vtanh.pop %v342
    %v361 = vtanh.pop %v347
    %v362 = vtanh.pop %v352
    %v363 = vtanh.pop %v357
    %v364 = vld [vmem:[%s5] sm:$0xff]
    %v365 = vld [vmem:[%s5 + $0x8] sm:$0xff]
    %v366 = vld [vmem:[%s5 + $0x10] sm:$0xff]
    %v367 = vld [vmem:[%s5 + $0x18] sm:$0xff]
    %369 = vset.pattern.permute.xlu0 0
    %370 = vperm.xlu0 %369, %v43
    %v371 = vpop.permute.xlu0 %370
    %374 = vset.pattern.permute.xlu0 0
    %375 = vperm.xlu0 %374, %v44
    %v376 = vpop.permute.xlu0 %375
    %379 = vset.pattern.permute.xlu0 0
    %380 = vperm.xlu0 %379, %v45
    %v381 = vpop.permute.xlu0 %380
    %384 = vset.pattern.permute.xlu0 0
    %385 = vperm.xlu0 %384, %v46
    %v386 = vpop.permute.xlu0 %385
    %v389 = vsel %vm262, %v364, 0
    %v392 = vsel %vm262, %v365, 0
    %v395 = vsel %vm262, %v366, 0
    %v398 = vsel %vm262, %v367, 0
    %400 = vmatprep.subr.mxu0 0.0
    %401 = vmatpush1.msra.mxu0 0.0
    %402 = vmatprep.subr.mxu0 0.0
    %403 = vmatpush1.msra.mxu0 0.0
    %404 = vmatprep.subr.mxu0 0.0
    %405 = vmatpush1.msra.mxu0 0.0
    %406 = vmatprep.subr.mxu0 0.0
    %407 = vmatpush1.msra.mxu0 0.0
    %408 = vmatprep.subr.mxu0 0.0
    %409 = vmatpush1.msra.mxu0 0.0
    %410 = vmatprep.subr.mxu0 0.0
    %411 = vmatpush1.msra.mxu0 0.0
    %412 = vmatprep.subr.mxu0 0.0
    %413 = vmatpush1.msra.mxu0 0.0
    %414 = vmatprep.subr.mxu0 0.0
    %415 = vmatpush1.msra.mxu0 0.0
    %416 = vmatprep.subr.mxu0 0.0
    %417 = vmatpush1.msra.mxu0 0.0
    %418 = vmatprep.subr.mxu0 0.0
    %419 = vmatpush1.msra.mxu0 0.0
    %420 = vmatprep.subr.mxu0 0.0
    %421 = vmatpush1.msra.mxu0 0.0
    %422 = vmatprep.subr.mxu0 0.0
    %423 = vmatpush1.msra.mxu0 0.0
    %424 = vmatprep.subr.mxu0 0.0
    %425 = vmatpush1.msra.mxu0 %v363
    %426 = vmatprep.subr.mxu0 0.0
    %427 = vmatpush1.msra.mxu0 %v362
    %428 = vmatprep.subr.mxu0 0.0
    %429 = vmatpush1.msra.mxu0 %v361
    %430 = vmatprep.subr.mxu0 0.0
    %431 = vmatpush1.msra.mxu0 %v360
    %432 = vmatprep.subr.mxu0 0.0
    %433 = vmatpush2.msra.mxu0 0.0
    %434 = vmatprep.subr.mxu0 0.0
    %435 = vmatpush2.msra.mxu0 0.0
    %436 = vmatprep.subr.mxu0 0.0
    %437 = vmatpush2.msra.mxu0 0.0
    %438 = vmatprep.subr.mxu0 0.0
    %439 = vmatpush2.msra.mxu0 0.0
    %440 = vmatprep.subr.mxu0 0.0
    %441 = vmatpush2.msra.mxu0 0.0
    %442 = vmatprep.subr.mxu0 0.0
    %443 = vmatpush2.msra.mxu0 0.0
    %444 = vmatprep.subr.mxu0 0.0
    %445 = vmatpush2.msra.mxu0 0.0
    %446 = vmatprep.subr.mxu0 0.0
    %447 = vmatpush2.msra.mxu0 0.0
    %448 = vmatprep.subr.mxu0 0.0
    %449 = vmatpush2.msra.mxu0 0.0
    %450 = vmatprep.subr.mxu0 0.0
    %451 = vmatpush2.msra.mxu0 0.0
    %452 = vmatprep.subr.mxu0 0.0
    %453 = vmatpush2.msra.mxu0 0.0
    %454 = vmatprep.subr.mxu0 0.0
    %455 = vmatpush2.msra.mxu0 0.0
    %456 = vmatprep.subr.mxu0 0.0
    %457 = vmatpush2.msra.mxu0 0.0
    %458 = vmatprep.subr.mxu0 0.0
    %459 = vmatpush2.msra.mxu0 0.0
    %460 = vmatprep.subr.mxu0 0.0
    %461 = vmatpush2.msra.mxu0 0.0
    %462 = vmatprep.subr.mxu0 0.0
    %463 = vmatpush2.msra.mxu0 0.0
    %464 = vmatprep.mubr.f32.mxu0 0.0
    %465 = vmatmul.mubr.f32.gmra.mxu0 %v389
    %v466 = vpop.f32.mrf.mxu0
    %v467 = vadd.f32 %v371, %v466
    %v468 = vpop.f32.mrf.mxu0
    %469 = vmatprep.mubr.f32.mxu0 0.0
    %470 = vmatmul.mubr.f32.gmra.mxu0 %v392
    %v471 = vpop.f32.mrf.mxu0
    %v472 = vadd.f32 %v376, %v471
    %v473 = vpop.f32.mrf.mxu0
    %474 = vmatprep.mubr.f32.mxu0 0.0
    %475 = vmatmul.mubr.f32.gmra.mxu0 %v395
    %v476 = vpop.f32.mrf.mxu0
    %v477 = vadd.f32 %v381, %v476
    %v478 = vpop.f32.mrf.mxu0
    %479 = vmatprep.mubr.f32.mxu0 0.0
    %480 = vmatmul.mubr.f32.gmra.mxu0 %v398
    %v481 = vpop.f32.mrf.mxu0
    %v482 = vadd.f32 %v386, %v481
    %v483 = vpop.f32.mrf.mxu0
    %484 = vdwg.mxu0
    %v485 = vtanh.pop %v467
    %v486 = vtanh.pop %v472
    %v487 = vtanh.pop %v477
    %v488 = vtanh.pop %v482
    %v489 = vld [vmem:[%s7] sm:$0xff]
    %v490 = vld [vmem:[%s7 + $0x8] sm:$0xff]
    %v491 = vld [vmem:[%s7 + $0x10] sm:$0xff]
    %v492 = vld [vmem:[%s7 + $0x18] sm:$0xff]
    %494 = vset.pattern.permute.xlu0 0
    %495 = vperm.xlu0 %494, %v489
    %v496 = vpop.permute.xlu0 %495
    %499 = vset.pattern.permute.xlu0 0
    %500 = vperm.xlu0 %499, %v490
    %v501 = vpop.permute.xlu0 %500
    %504 = vset.pattern.permute.xlu0 0
    %505 = vperm.xlu0 %504, %v491
    %v506 = vpop.permute.xlu0 %505
    %509 = vset.pattern.permute.xlu0 0
    %510 = vperm.xlu0 %509, %v492
    %v511 = vpop.permute.xlu0 %510
    %v513 = vmul.f32 %v496, %v485
    %v514 = vmul.f32 %v501, %v486
    %v515 = vmul.f32 %v506, %v487
    %v516 = vmul.f32 %v511, %v488
    %v517 = vadd.f32 %v513, %v514
    %v518 = vadd.f32 %v517, %v515
    %v519 = vadd.f32 %v518, %v516
    %v520 = vrot.slane %v519, 4
    %v521 = vadd.f32 %v519, %v520
    %v522 = vrot.slane %v521, 2
    %v523 = vadd.f32 %v521, %v522
    %v524 = vrot.slane %v523, 1
    %v525 = vadd.f32 %v523, %v524
    %527 = vset.pattern.permute.xlu0 0
    %528 = vperm.xlu0 %527, %v47
    %v529 = vpop.permute.xlu0 %528
    %v531 = vlaneseq
    %v532 = vshrl.u32 %v531, 7
    %v533 = vsub.s32 0, %v532
    %v534 = vrot.slane %v529, %v533
    %v535 = vadd.f32 %v525, %v534
    %vm536 = vcmp.gt.f32.partialorder %v535, 20.0
    %v537 = vmin.f32 %v535, 20.0
    %v538 = vmul.f32 %v537, 1.442695
    %v539 = vpow.pop %v538
    %v540 = vadd.f32 %v539, 1.0
    %v541 = vlog2.pop %v540
    %v542 = vmul.f32 %v541, 0.6931472
    %v543 = vmul.f32 -0.5, %v539
    %v544 = vadd.f32 %v543, 1.0
    %v545 = vmul.f32 %v544, %v539
    %v546 = vand.u32 2147483647, %v539
    %vm547 = vcmp.lt.f32.partialorder %v546, 0.0004427343
    %v548 = vsel %vm547, %v545, %v542
    %v549 = vsel %vm536, %v535, %v548
    %v550 = vmax.f32 %v549, 1e-08
    %v551 = vmin.f32 %v550, 1e+08
    %552 = vst [vmem:[#allocation3] sm:$0x1] %v551
    // Predicated region
    $region38: #{tpu_custom_call.1} parent=1 // pred_check
      _
    $region39: #{tpu_custom_call.1} parent=1 // pred_check_branch
      %554 = sbr.rel (0) target = $region41
    $region40: #{tpu_custom_call.1} parent=1 // pred_region
      %s556 = ssub.s32 16, 16
      %557 = vsyncadd [#allocation4], %s556
      %s559 = sshll.u32 [#allocation3], 4
      %s560 = int_to_ptr.vmem [resolvable:$true] %s559
      %562 = dma.vmem_to_hbm [thread:$0]  %s560, 16, %s9, [#allocation4]
    $region41: #{tpu_custom_call.1} parent=1 // pred_fallthru
      _
    // Predicated region
    $region42: #{tpu_custom_call.1} parent=1 // pred_check
      _
    $region43: #{tpu_custom_call.1} parent=1 // pred_check_branch
      %564 = sbr.rel (0) target = $region45
    $region44: #{tpu_custom_call.1} parent=1 // pred_region
      %565 = dma.done [#allocation4], 16
    $region45: #{tpu_custom_call.1} parent=1 // pred_fallthru
      _
    %566 = vsyncpa [#allocation4], 1

</llo_original>
